<compile_context>
chip_gen: v6e
topology: v6e:2x2x1
jax: 0.10.0
libtpu: 0.0.40
codegen_flags: <defaults>
</compile_context>

<pallas_src>
import functools

import jax
import jax.numpy as jnp
from jax.experimental import pallas as pl
from jax.experimental.pallas import tpu as pltpu

LN_EPS = 1e-5


def convgru_kernel(hx_ref, wbig_ref, wqh_ref, gamma_ref, beta_ref, out_ref):
    """One (C, tile_n) spatial tile: fused GRU cell + channel LayerNorm."""
    C = out_ref.shape[0]

    hx = hx_ref[...]                                    # (2C, Tn), f32 load
    h = hx[:C].astype(jnp.float32)                      # aligned sublane slice (C mult of 8)
    hx_b = hx.astype(jnp.bfloat16)                      # MXU operand

    # One MXU pass: wbig = [Wz; Wr; [0 | Wq_x]] (3C, 2C) bf16, f32 accumulation.
    zrqx = jnp.dot(wbig_ref[...], hx_b, preferred_element_type=jnp.float32)  # (3C, Tn)

    # sigmoid(v) = 0.5 * (tanh(v/2) + 1): one EUP push instead of exp+divide.
    z = 0.5 * jnp.tanh(0.5 * zrqx[:C]) + 0.5
    r = 0.5 * jnp.tanh(0.5 * zrqx[C:2 * C]) + 0.5
    qx = zrqx[2 * C:]                                   # Wq_x @ x

    # q = Wq_h @ (r*h) + Wq_x @ x   (per the spec module, q has NO tanh).
    rh = (r * h).astype(jnp.bfloat16)
    q = qx + jnp.dot(wqh_ref[...], rh, preferred_element_type=jnp.float32)   # (C, Tn)

    # GRU blend: out = (1-z)*h + z*q  ==  h + z*(q - h)   (3 VPU ops).
    out = h + z * (q - h)

    # LayerNorm over channels (sublane axis), biased variance, eps = 1e-5.
    mean = jnp.mean(out, axis=0, keepdims=True)
    cen = out - mean
    var = jnp.mean(cen * cen, axis=0, keepdims=True)
    normed = cen * jax.lax.rsqrt(var + LN_EPS)

    out_ref[...] = (normed * gamma_ref[...] + beta_ref[...]).astype(out_ref.dtype)


def _pick_tile_n(n, c, *, vmem_budget_bytes=8 << 20, min_grid=2):
    """Lane-dense spatial tile: largest divisor of N (multiple of 128) whose
    double-buffered in/out blocks + f32 temporaries fit a conservative VMEM
    budget (safe under v5e's 16 MiB scoped default and v7x's 32 MiB default of
    64 MiB physical), then halved (down to 128) until the grid has >= min_grid
    'parallel' steps so v7x's two TensorCores both get work."""
    if n % 128 != 0:
        return n  # full-extent block is always a legal BlockSpec

    def fits(t):
        io = 2 * (3 * c) * t * 4        # double-buffered (2C,t) input + (C,t) output, f32
        tmp = 10 * c * t * 4            # zrqx / h / z / r / q / out / LN temporaries, f32
        return io + tmp <= vmem_budget_bytes

    tile = 128
    for cand in (2048, 1024, 512, 256, 128):
        if n % cand == 0 and fits(cand):
            tile = cand
            break
    while n // tile < min_grid and tile > 128 and n % (tile // 2) == 0:
        tile //= 2
    return tile


def pack_params(wz, wr, wq, gamma, beta):
    """One-time parameter packing.  Hoist OUT of any recurrent loop: in a scan
    over time-steps these concats/casts would otherwise cost as much as the
    kernel itself at small problem sizes."""
    C = wz.shape[0]
    wq_h, wq_x = wq[:, :C], wq[:, C:]
    # wbig rows: [Wz; Wr; [0 | Wq_x]] so the first MXU pass also yields Wq_x @ x.
    wbig = jnp.concatenate(
        [wz, wr, jnp.concatenate([jnp.zeros((C, C), wq.dtype), wq_x], axis=1)],
        axis=0,
    ).astype(jnp.bfloat16)                              # (3C, 2C)
    wqh = wq_h.astype(jnp.bfloat16)                     # (C, C)
    gamma2 = jnp.asarray(gamma, jnp.float32).reshape(C, 1)
    beta2 = jnp.asarray(beta, jnp.float32).reshape(C, 1)
    return wbig, wqh, gamma2, beta2


@functools.partial(jax.jit, static_argnames=("tile_n",))
def convgru_forward(h_chw, x_chw, wbig, wqh, gamma2, beta2, *, tile_n=None):
    """h_chw, x_chw: (C, H, W).  Packed params from pack_params().
    Returns (C, H, W), matching the PyTorch module's output."""
    C, H, W = h_chw.shape
    N = H * W
    assert wbig.shape == (3 * C, 2 * C) and wqh.shape == (C, C)
    assert C % 8 == 0, "channel count should be a multiple of 8 (f32 sublane tile)"
    if tile_n is None:
        tile_n = _pick_tile_n(N, C)
    assert N % tile_n == 0, "spatial size must tile evenly"

    # Pre-concatenate hx once in HBM -> single activation ref, no in-kernel copy.
    hx = jnp.concatenate([h_chw.reshape(C, N), x_chw.reshape(C, N)], axis=0)  # (2C, N)

    hx_spec = pl.BlockSpec((2 * C, tile_n), lambda i: (0, i))
    out_spec = pl.BlockSpec((C, tile_n), lambda i: (0, i))
    wbig_spec = pl.BlockSpec((3 * C, 2 * C), lambda i: (0, 0))
    wqh_spec = pl.BlockSpec((C, C), lambda i: (0, 0))
    vec_spec = pl.BlockSpec((C, 1), lambda i: (0, 0))

    cost = pl.CostEstimate(
        flops=2 * (3 * C * 2 * C + C * C) * N,          # two MXU contractions
        transcendentals=2 * C * N + N,                  # two tanh gates + rsqrt per column
        bytes_accessed=(3 * C * N) * 4 + (3 * C * 2 * C + C * C) * 2 + 2 * C * 4,
    )

    out_cn = pl.pallas_call(
        convgru_kernel,
        out_shape=jax.ShapeDtypeStruct((C, N), h_chw.dtype),
        grid=(N // tile_n,),
        in_specs=[hx_spec, wbig_spec, wqh_spec, vec_spec, vec_spec],
        out_specs=out_spec,
        compiler_params=pltpu.CompilerParams(
            dimension_semantics=("parallel",),
            vmem_limit_bytes=32 * 1024 * 1024,          # explicit budget, fits all gens
        ),
        cost_estimate=cost,
    )(hx, wbig, wqh, gamma2, beta2)

    return out_cn.reshape(C, H, W)


def convgru_reference(h_chw, x_chw, wz, wr, wq, gamma, beta, *, mxu_dtype=None):
    """Pure-JAX reference mirroring the PyTorch forward (NCHW, 1x1 convs).
    If mxu_dtype is set, matmul operands are rounded to it (to match the
    kernel's bf16 MXU operands) while accumulating in f32."""
    C, H, W = h_chw.shape
    h = h_chw.reshape(C, H * W).astype(jnp.float32)
    x = x_chw.reshape(C, H * W).astype(jnp.float32)

    def mm(w, a):
        if mxu_dtype is not None:
            w = w.astype(mxu_dtype).astype(jnp.float32)
            a = a.astype(mxu_dtype).astype(jnp.float32)
        return w @ a

    hx = jnp.concatenate([h, x], axis=0)                # (2C, N)
    z = jax.nn.sigmoid(mm(wz, hx))
    r = jax.nn.sigmoid(mm(wr, hx))
    new_x = jnp.concatenate([r * h, x], axis=0)
    q = mm(wq, new_x)
    out = (1.0 - z) * h + z * q                         # (C, N)

    nc = out.T                                          # (N, C) == permute(1,2,0) flattened
    mean = jnp.mean(nc, axis=-1, keepdims=True)
    var = jnp.mean((nc - mean) ** 2, axis=-1, keepdims=True)
    nc = (nc - mean) / jnp.sqrt(var + LN_EPS) * gamma + beta
    return nc.T.reshape(C, H, W)


if __name__ == "__main__":
    C, H, W = 32, 16, 16

    key = jax.random.PRNGKey(0)
    k_h, k_x, k_wz, k_wr, k_wq, k_g, k_b = jax.random.split(key, 7)

    h = jax.random.normal(k_h, (C, H, W), dtype=jnp.float32)
    x = jax.random.normal(k_x, (C, H, W), dtype=jnp.float32)

    # Conv2d(2C -> C, k=1, bias=False) weights: (C_out, C_in) = (C, 2C).
    scale = (2.0 / (2 * C)) ** 0.5
    wz = jax.random.normal(k_wz, (C, 2 * C), dtype=jnp.float32) * scale
    wr = jax.random.normal(k_wr, (C, 2 * C), dtype=jnp.float32) * scale
    wq = jax.random.normal(k_wq, (C, 2 * C), dtype=jnp.float32) * scale

    # LayerNorm affine params (perturbed from default init so they are tested).
    gamma = 1.0 + 0.1 * jax.random.normal(k_g, (C,), dtype=jnp.float32)
    beta = 0.1 * jax.random.normal(k_b, (C,), dtype=jnp.float32)

    params = pack_params(wz, wr, wq, gamma, beta)       # once, outside any recurrent loop
    out = jax.block_until_ready(convgru_forward(h, x, *params))
    assert out.shape == (C, H, W)

    # Tight check vs. a reference that applies the same bf16 rounding to MXU
    # operands (catches any algorithmic/layout bug).
    ref_matched = convgru_reference(h, x, wz, wr, wq, gamma, beta, mxu_dtype=jnp.bfloat16)
    err_tight = float(jnp.max(jnp.abs(out - ref_matched)))
    assert err_tight < 2e-3, f"max abs err vs bf16-matched reference: {err_tight}"

    # Loose check vs. the full-f32 reference mirroring the PyTorch forward;
    # remaining difference is only the bf16 rounding of the MXU operands.
    ref_f32 = convgru_reference(h, x, wz, wr, wq, gamma, beta)
    err_loose = float(jnp.max(jnp.abs(out - ref_f32)))
    assert err_loose < 5e-2, f"max abs err vs f32 reference: {err_loose}"

    print("KERNEL_OK")
</pallas_src>

<mosaic_0001>
module attributes {stable_mosaic.version = 11 : i64} {
  func.func @convgru_kernel(%arg0: i32, %arg1: memref<64x128xf32, #tpu.memory_space<vmem>>, %arg2: memref<96x64xbf16, #tpu.memory_space<vmem>>, %arg3: memref<32x32xbf16, #tpu.memory_space<vmem>>, %arg4: memref<32x1xf32, #tpu.memory_space<vmem>>, %arg5: memref<32x1xf32, #tpu.memory_space<vmem>>, %arg6: memref<32x128xf32, #tpu.memory_space<vmem>>) attributes {dimension_semantics = [#tpu.dimension_semantics<parallel>], iteration_bounds = array<i64: 2>, scalar_prefetch = 0 : i64, scratch_operands = 0 : i64, tpu.core_type = #tpu.core_type<tc>, window_params = [{transform_indices = @transform_0, window_bounds = array<i64: 64, 128>}, {pipeline_mode = #tpu.pipeline_mode<synchronous>, transform_indices = @transform_1, window_bounds = array<i64: 96, 64>}, {pipeline_mode = #tpu.pipeline_mode<synchronous>, transform_indices = @transform_2, window_bounds = array<i64: 32, 32>}, {pipeline_mode = #tpu.pipeline_mode<synchronous>, transform_indices = @transform_3, window_bounds = array<i64: 32, 1>}, {pipeline_mode = #tpu.pipeline_mode<synchronous>, transform_indices = @transform_4, window_bounds = array<i64: 32, 1>}, {transform_indices = @transform_5, window_bounds = array<i64: 32, 128>}]} {
    %c0 = arith.constant 0 : index
    %c0_0 = arith.constant 0 : index
    %0 = vector.load %arg1[%c0, %c0_0] : memref<64x128xf32, #tpu.memory_space<vmem>>, vector<64x128xf32>
    %1 = vector.extract_strided_slice %0 {offsets = [0, 0], sizes = [32, 128], strides = [1, 1]} : vector<64x128xf32> to vector<32x128xf32>
    %2 = arith.truncf %0 : vector<64x128xf32> to vector<64x128xbf16>
    %c0_1 = arith.constant 0 : index
    %c0_2 = arith.constant 0 : index
    %3 = vector.load %arg2[%c0_1, %c0_2] : memref<96x64xbf16, #tpu.memory_space<vmem>>, vector<96x64xbf16>
    %cst = arith.constant dense<0.000000e+00> : vector<96x128xf32>
    %4 = tpu.matmul %3, %2, %cst {dimension_numbers = #tpu.dot_dimension_numbers<[1], [0], [0], [1], [0, 0, 1, 1], [], []>} : vector<96x64xbf16>, vector<64x128xbf16>, vector<96x128xf32> -> vector<96x128xf32>
    %5 = vector.extract_strided_slice %4 {offsets = [0, 0], sizes = [32, 128], strides = [1, 1]} : vector<96x128xf32> to vector<32x128xf32>
    %cst_3 = arith.constant 5.000000e-01 : f32
    %6 = vector.broadcast %cst_3 : f32 to vector<32x128xf32>
    %7 = arith.mulf %6, %5 : vector<32x128xf32>
    %8 = math.tanh %7 : vector<32x128xf32>
    %cst_4 = arith.constant 5.000000e-01 : f32
    %9 = vector.broadcast %cst_4 : f32 to vector<32x128xf32>
    %10 = arith.mulf %9, %8 : vector<32x128xf32>
    %cst_5 = arith.constant 5.000000e-01 : f32
    %11 = vector.broadcast %cst_5 : f32 to vector<32x128xf32>
    %12 = arith.addf %10, %11 : vector<32x128xf32>
    %13 = vector.extract_strided_slice %4 {offsets = [32, 0], sizes = [32, 128], strides = [1, 1]} : vector<96x128xf32> to vector<32x128xf32>
    %cst_6 = arith.constant 5.000000e-01 : f32
    %14 = vector.broadcast %cst_6 : f32 to vector<32x128xf32>
    %15 = arith.mulf %14, %13 : vector<32x128xf32>
    %16 = math.tanh %15 : vector<32x128xf32>
    %cst_7 = arith.constant 5.000000e-01 : f32
    %17 = vector.broadcast %cst_7 : f32 to vector<32x128xf32>
    %18 = arith.mulf %17, %16 : vector<32x128xf32>
    %cst_8 = arith.constant 5.000000e-01 : f32
    %19 = vector.broadcast %cst_8 : f32 to vector<32x128xf32>
    %20 = arith.addf %18, %19 : vector<32x128xf32>
    %21 = vector.extract_strided_slice %4 {offsets = [64, 0], sizes = [32, 128], strides = [1, 1]} : vector<96x128xf32> to vector<32x128xf32>
    %22 = arith.mulf %20, %1 : vector<32x128xf32>
    %23 = arith.truncf %22 : vector<32x128xf32> to vector<32x128xbf16>
    %c0_9 = arith.constant 0 : index
    %c0_10 = arith.constant 0 : index
    %24 = vector.load %arg3[%c0_9, %c0_10] : memref<32x32xbf16, #tpu.memory_space<vmem>>, vector<32x32xbf16>
    %cst_11 = arith.constant dense<0.000000e+00> : vector<32x128xf32>
    %25 = tpu.matmul %24, %23, %cst_11 {dimension_numbers = #tpu.dot_dimension_numbers<[1], [0], [0], [1], [0, 0, 1, 1], [], []>} : vector<32x32xbf16>, vector<32x128xbf16>, vector<32x128xf32> -> vector<32x128xf32>
    %26 = arith.addf %21, %25 : vector<32x128xf32>
    %27 = arith.subf %26, %1 : vector<32x128xf32>
    %28 = arith.mulf %12, %27 : vector<32x128xf32>
    %29 = arith.addf %1, %28 : vector<32x128xf32>
    %cst_12 = arith.constant dense<0.000000e+00> : vector<128xf32>
    %30 = vector.multi_reduction <add>, %29, %cst_12 [0] : vector<32x128xf32> to vector<128xf32>
    %31 = vector.shape_cast %30 : vector<128xf32> to vector<1x128xf32>
    %cst_13 = arith.constant 3.200000e+01 : f32
    %32 = vector.broadcast %cst_13 : f32 to vector<1x128xf32>
    %33 = arith.divf %31, %32 : vector<1x128xf32>
    %34 = vector.broadcast %33 : vector<1x128xf32> to vector<32x128xf32>
    %35 = arith.subf %29, %34 : vector<32x128xf32>
    %36 = arith.mulf %35, %35 : vector<32x128xf32>
    %cst_14 = arith.constant dense<0.000000e+00> : vector<128xf32>
    %37 = vector.multi_reduction <add>, %36, %cst_14 [0] : vector<32x128xf32> to vector<128xf32>
    %38 = vector.shape_cast %37 : vector<128xf32> to vector<1x128xf32>
    %cst_15 = arith.constant 3.200000e+01 : f32
    %39 = vector.broadcast %cst_15 : f32 to vector<1x128xf32>
    %40 = arith.divf %38, %39 : vector<1x128xf32>
    %cst_16 = arith.constant 9.99999974E-6 : f32
    %41 = vector.broadcast %cst_16 : f32 to vector<1x128xf32>
    %42 = arith.addf %40, %41 : vector<1x128xf32>
    %43 = math.rsqrt %42 : vector<1x128xf32>
    %44 = vector.broadcast %43 : vector<1x128xf32> to vector<32x128xf32>
    %45 = arith.mulf %35, %44 : vector<32x128xf32>
    %c0_17 = arith.constant 0 : index
    %c0_18 = arith.constant 0 : index
    %46 = vector.load %arg4[%c0_17, %c0_18] : memref<32x1xf32, #tpu.memory_space<vmem>>, vector<32x1xf32>
    %47 = vector.broadcast %46 : vector<32x1xf32> to vector<32x128xf32>
    %48 = arith.mulf %45, %47 : vector<32x128xf32>
    %c0_19 = arith.constant 0 : index
    %c0_20 = arith.constant 0 : index
    %49 = vector.load %arg5[%c0_19, %c0_20] : memref<32x1xf32, #tpu.memory_space<vmem>>, vector<32x1xf32>
    %50 = vector.broadcast %49 : vector<32x1xf32> to vector<32x128xf32>
    %51 = arith.addf %48, %50 : vector<32x128xf32>
    %c0_21 = arith.constant 0 : index
    %c0_22 = arith.constant 0 : index
    %52 = vector.load %arg6[%c0_21, %c0_22] : memref<32x128xf32, #tpu.memory_space<vmem>>, vector<32x128xf32>
    tpu.vector_store %arg6[%c0_21, %c0_22], %51 {strides = array<i32>} : memref<32x128xf32, #tpu.memory_space<vmem>>, vector<32x128xf32>,
    return
  }
  func.func @transform_0(%arg0: i32) -> (i32, i32) {
    %c0_i32 = arith.constant 0 : i32
    %c0_i32_0 = arith.constant 0 : i32
    return %c0_i32, %arg0 : i32, i32
  }
  func.func @transform_1(%arg0: i32) -> (i32, i32) {
    %c0_i32 = arith.constant 0 : i32
    %c0_i32_0 = arith.constant 0 : i32
    %c0_i32_1 = arith.constant 0 : i32
    return %c0_i32, %c0_i32_0 : i32, i32
  }
  func.func @transform_2(%arg0: i32) -> (i32, i32) {
    %c0_i32 = arith.constant 0 : i32
    %c0_i32_0 = arith.constant 0 : i32
    %c0_i32_1 = arith.constant 0 : i32
    return %c0_i32, %c0_i32_0 : i32, i32
  }
  func.func @transform_3(%arg0: i32) -> (i32, i32) {
    %c0_i32 = arith.constant 0 : i32
    %c0_i32_0 = arith.constant 0 : i32
    %c0_i32_1 = arith.constant 0 : i32
    return %c0_i32, %c0_i32_0 : i32, i32
  }
  func.func @transform_4(%arg0: i32) -> (i32, i32) {
    %c0_i32 = arith.constant 0 : i32
    %c0_i32_0 = arith.constant 0 : i32
    %c0_i32_1 = arith.constant 0 : i32
    return %c0_i32, %c0_i32_0 : i32, i32
  }
  func.func @transform_5(%arg0: i32) -> (i32, i32) {
    %c0_i32 = arith.constant 0 : i32
    %c0_i32_0 = arith.constant 0 : i32
    return %c0_i32, %arg0 : i32, i32
  }
}

</mosaic_0001>

<llo_original>
// kernel: convgru_forward.1
$region0: #{convgru_forward.1}
  #allocation0 [shape = 'u32[]', space=smem, size = 0x4, offset = 0x4, fixed_abs, tag = 'smem constant byte address 0x4 - core index']
  #allocation1 [shape = 'u32[144,128]{1,0:T(1,128)}', space=vmem, size = 0x12000, scoped, tag = 'internal scratch']
  %s0 = inlined_call_operand.vmem [shape: f32[64,256], index: 0, kind: input, shape index: {}]
  %s1 = inlined_call_operand.vmem [shape: bf16[96,64], index: 1, kind: input, shape index: {}]
  %s2 = inlined_call_operand.vmem [shape: bf16[32,32], index: 2, kind: input, shape index: {}]
  %s3 = inlined_call_operand.vmem [shape: f32[32,1], index: 3, kind: input, shape index: {}]
  %s4 = inlined_call_operand.vmem [shape: f32[32,1], index: 4, kind: input, shape index: {}]
  %s5 = inlined_call_operand.vmem [shape: f32[32,256], index: 5, kind: output, shape index: {}]
  %s6 = sld [smem:[#allocation0]]
  $region125: #{convgru_forward.1} parent=0
    _
  %s8 = ssub.s32 1, %s6
  %s9 = scalar_select 0, %s8, %s6
  $region1: #{convgru_forward.1} parent=0
    #allocation2 [shape = 'u8[65536]{0}', space=vmem, size = 0x10000, scoped, tag = 'input window, operand 0']
    #allocation3 [shape = 'u8[32768]{0}', space=vmem, size = 0x8000, scoped, tag = 'output window, operand 0']
    loop: start=0, step=1, limit=4
    $region2: #{convgru_forward.1} parent=1 // loop_pre_header
      _
    $region3: #{convgru_forward.1} parent=1 // loop_header
      %s11 = sphi 0, %s15
      %p12 = scmp.ge.s32.totalorder %s11, 4
      %s21 = sphi 0, %s23
      %s24 = sphi 0, %s21
      %s25 = sphi 0, %s24
      %s41 = sphi 0, %s25
      %s45 = sphi 0, %s45
      %s47 = sphi 0, %s45
      %s48 = sphi 0, %s47
      %s62 = sphi 0, %s48
      %s66 = sphi 0, %s66
      %s68 = sphi 0, %s66
      %s69 = sphi 0, %s68
      %s83 = sphi 0, %s69
      %s87 = sphi 0, %s87
      %s89 = sphi 0, %s87
      %s90 = sphi 0, %s89
      %s104 = sphi 0, %s90
      %s108 = sphi 0, %s108
      %s110 = sphi 0, %s108
      %s111 = sphi 0, %s110
      %s125 = sphi 0, %s111
      %s131 = sphi 0, %s133
      %s134 = sphi 0, %s131
      %s135 = sphi 0, %s134
      %s151 = sphi 0, %s135
    $region4: #{convgru_forward.1} parent=1 // loop_header_branch
      %14 = sbr.rel (%p12) target = $region8
    $region5: #{convgru_forward.1} parent=1 // loop_body
      %s16 = ssub.s32 %s11, 1
      %s17 = ssub.s32 %s11, 2
      %s18 = sadd.s32 %s11, 1
      %s19 = ssub.s32 %s11, %s18
      %p20 = scmp.eq.s32.totalorder %s19, 0
      %s22 = sadd.s32 %s21, 1
      %s23 = scalar_select %p20, %s21, %s22
      %p26 = pneg %p20
      %p27 = scmp.eq.s32.totalorder %s11, 1
      %p28 = por %p26, %p27
      %p29 = scmp.ne.s32.totalorder %s21, %s24
      %p30 = scmp.eq.s32.totalorder %s11, 0
      %p31 = por %p29, %p30
      %p32 = scmp.ne.s32.totalorder %s21, %s24
      %p33 = scmp.eq.s32.totalorder %s16, 1
      %p34 = por %p32, %p33
      %p35 = scmp.ne.s32.totalorder %s24, %s25
      %p36 = scmp.eq.s32.totalorder %s16, 0
      %p37 = por %p35, %p36
      %p38 = scmp.ne.s32.totalorder %s24, %s25
      %p39 = scmp.eq.s32.totalorder %s17, 1
      %p40 = por %p38, %p39
      %p42 = scmp.ne.s32.totalorder %s25, %s41
      %p43 = scmp.eq.s32.totalorder %s17, 0
      %p44 = por %p42, %p43
      %s46 = sadd.s32 %s45, 1
      %p49 = scmp.eq.s32.totalorder %s11, 1
      %p50 = scmp.ne.s32.totalorder %s45, %s47
      %p51 = scmp.eq.s32.totalorder %s11, 0
      %p52 = por %p50, %p51
      %p53 = scmp.ne.s32.totalorder %s45, %s47
      %p54 = scmp.eq.s32.totalorder %s16, 1
      %p55 = por %p53, %p54
      %p56 = scmp.ne.s32.totalorder %s47, %s48
      %p57 = scmp.eq.s32.totalorder %s16, 0
      %p58 = por %p56, %p57
      %p59 = scmp.ne.s32.totalorder %s47, %s48
      %p60 = scmp.eq.s32.totalorder %s17, 1
      %p61 = por %p59, %p60
      %p63 = scmp.ne.s32.totalorder %s48, %s62
      %p64 = scmp.eq.s32.totalorder %s17, 0
      %p65 = por %p63, %p64
      %s67 = sadd.s32 %s66, 1
      %p70 = scmp.eq.s32.totalorder %s11, 1
      %p71 = scmp.ne.s32.totalorder %s66, %s68
      %p72 = scmp.eq.s32.totalorder %s11, 0
      %p73 = por %p71, %p72
      %p74 = scmp.ne.s32.totalorder %s66, %s68
      %p75 = scmp.eq.s32.totalorder %s16, 1
      %p76 = por %p74, %p75
      %p77 = scmp.ne.s32.totalorder %s68, %s69
      %p78 = scmp.eq.s32.totalorder %s16, 0
      %p79 = por %p77, %p78
      %p80 = scmp.ne.s32.totalorder %s68, %s69
      %p81 = scmp.eq.s32.totalorder %s17, 1
      %p82 = por %p80, %p81
      %p84 = scmp.ne.s32.totalorder %s69, %s83
      %p85 = scmp.eq.s32.totalorder %s17, 0
      %p86 = por %p84, %p85
      %s88 = sadd.s32 %s87, 1
      %p91 = scmp.eq.s32.totalorder %s11, 1
      %p92 = scmp.ne.s32.totalorder %s87, %s89
      %p93 = scmp.eq.s32.totalorder %s11, 0
      %p94 = por %p92, %p93
      %p95 = scmp.ne.s32.totalorder %s87, %s89
      %p96 = scmp.eq.s32.totalorder %s16, 1
      %p97 = por %p95, %p96
      %p98 = scmp.ne.s32.totalorder %s89, %s90
      %p99 = scmp.eq.s32.totalorder %s16, 0
      %p100 = por %p98, %p99
      %p101 = scmp.ne.s32.totalorder %s89, %s90
      %p102 = scmp.eq.s32.totalorder %s17, 1
      %p103 = por %p101, %p102
      %p105 = scmp.ne.s32.totalorder %s90, %s104
      %p106 = scmp.eq.s32.totalorder %s17, 0
      %p107 = por %p105, %p106
      %s109 = sadd.s32 %s108, 1
      %p112 = scmp.eq.s32.totalorder %s11, 1
      %p113 = scmp.ne.s32.totalorder %s108, %s110
      %p114 = scmp.eq.s32.totalorder %s11, 0
      %p115 = por %p113, %p114
      %p116 = scmp.ne.s32.totalorder %s108, %s110
      %p117 = scmp.eq.s32.totalorder %s16, 1
      %p118 = por %p116, %p117
      %p119 = scmp.ne.s32.totalorder %s110, %s111
      %p120 = scmp.eq.s32.totalorder %s16, 0
      %p121 = por %p119, %p120
      %p122 = scmp.ne.s32.totalorder %s110, %s111
      %p123 = scmp.eq.s32.totalorder %s17, 1
      %p124 = por %p122, %p123
      %p126 = scmp.ne.s32.totalorder %s111, %s125
      %p127 = scmp.eq.s32.totalorder %s17, 0
      %p128 = por %p126, %p127
      %s129 = ssub.s32 %s11, %s18
      %p130 = scmp.eq.s32.totalorder %s129, 0
      %s132 = sadd.s32 %s131, 1
      %s133 = scalar_select %p130, %s131, %s132
      %p136 = pneg %p130
      %p137 = scmp.eq.s32.totalorder %s11, 1
      %p138 = por %p136, %p137
      %p139 = scmp.ne.s32.totalorder %s131, %s134
      %p140 = scmp.eq.s32.totalorder %s11, 0
      %p141 = por %p139, %p140
      %p142 = scmp.ne.s32.totalorder %s131, %s134
      %p143 = scmp.eq.s32.totalorder %s16, 1
      %p144 = por %p142, %p143
      %p145 = scmp.ne.s32.totalorder %s134, %s135
      %p146 = scmp.eq.s32.totalorder %s16, 0
      %p147 = por %p145, %p146
      %p148 = scmp.ne.s32.totalorder %s134, %s135
      %p149 = scmp.eq.s32.totalorder %s17, 1
      %p150 = por %p148, %p149
      %p152 = scmp.ne.s32.totalorder %s135, %s151
      %p153 = scmp.eq.s32.totalorder %s17, 0
      %p154 = por %p152, %p153
      %p155 = scmp.le.s32.totalorder 1, %s11
      %p156 = scmp.lt.s32.totalorder %s11, 3
      %p157 = pnand %p155, %p156
      %p158 = pneg %p157
      // Predicated region
      $region9: #{convgru_forward.1} parent=5 // pred_check
        _
      $region10: #{convgru_forward.1} parent=5 // pred_check_branch
        %160 = sbr.rel (%p157) target = $region12
      $region11: #{convgru_forward.1} parent=5 // pred_region
        %s161 = ssub.s32 %s11, 1
        // Predicated region
        $region13: #{convgru_forward.1} parent=11 // pred_check
          %p162 = pneg %p58
        $region14: #{convgru_forward.1} parent=11 // pred_check_branch
          %164 = sbr.rel (%p162) target = $region16
        $region15: #{convgru_forward.1} parent=11 // pred_region
          _
        $region16: #{convgru_forward.1} parent=11 // pred_fallthru
          _
        // Predicated region
        $region17: #{convgru_forward.1} parent=11 // pred_check
          %p165 = pneg %p79
        $region18: #{convgru_forward.1} parent=11 // pred_check_branch
          %167 = sbr.rel (%p165) target = $region20
        $region19: #{convgru_forward.1} parent=11 // pred_region
          _
        $region20: #{convgru_forward.1} parent=11 // pred_fallthru
          _
        // Predicated region
        $region21: #{convgru_forward.1} parent=11 // pred_check
          %p168 = pneg %p100
        $region22: #{convgru_forward.1} parent=11 // pred_check_branch
          %170 = sbr.rel (%p168) target = $region24
        $region23: #{convgru_forward.1} parent=11 // pred_region
          _
        $region24: #{convgru_forward.1} parent=11 // pred_fallthru
          _
        // Predicated region
        $region25: #{convgru_forward.1} parent=11 // pred_check
          %p171 = pneg %p121
        $region26: #{convgru_forward.1} parent=11 // pred_check_branch
          %173 = sbr.rel (%p171) target = $region28
        $region27: #{convgru_forward.1} parent=11 // pred_region
          _
        $region28: #{convgru_forward.1} parent=11 // pred_fallthru
          _
      $region12: #{convgru_forward.1} parent=5 // pred_fallthru
        _
      %p174 = scmp.lt.s32.totalorder %s11, 2
      // Predicated region
      $region29: #{convgru_forward.1} parent=5 // pred_check
        %p175 = pneg %p174
      $region30: #{convgru_forward.1} parent=5 // pred_check_branch
        %177 = sbr.rel (%p175) target = $region32
      $region31: #{convgru_forward.1} parent=5 // pred_region
        // Predicated region
        $region33: #{convgru_forward.1} parent=31 // pred_check
          %p178 = pneg %p31
        $region34: #{convgru_forward.1} parent=31 // pred_check_branch
          %180 = sbr.rel (%p178) target = $region36
        $region35: #{convgru_forward.1} parent=31 // pred_region
          %s181 = sand.u32 %s21, 1
          %s182 = sand.u32 %s21, 1
          %s183 = smul.addr %s182, 64
          %s184 = scalar_lea.vmem [#allocation2], %s183
          %s185 = smul.addr %s11, 8
          %s186 = scalar_lea.vmem %s0, %s185
          // Predicated region
          $region37: #{convgru_forward.1} parent=35 // pred_check
            _
          $region38: #{convgru_forward.1} parent=35 // pred_check_branch
            %188 = sbr.rel (0) target = $region40
          $region39: #{convgru_forward.1} parent=35 // pred_region
            // Predicated region
            $region41: #{convgru_forward.1} parent=39 // pred_check
              _
            $region42: #{convgru_forward.1} parent=39 // pred_check_branch
              %190 = sbr.rel (0) target = $region44
            $region43: #{convgru_forward.1} parent=39 // pred_region
              // Predicated region
              $region56: #{convgru_forward.1} parent=43 // pred_check
                _
              $region57: #{convgru_forward.1} parent=43 // pred_check_branch
                %220 = sbr.rel (0) target = $region59
              $region58: #{convgru_forward.1} parent=43 // pred_region
                loop: start=0, step=1, limit=1
                $region60: #{convgru_forward.1} parent=58 // loop_pre_header
                  _
                $region61: #{convgru_forward.1} parent=58 // loop_header
                  %s222 = sphi 0, %s226
                  %p223 = scmp.ge.s32.totalorder %s222, 1
                  %s227 = sphi %s186, %s186
                  %s228 = sphi %s184, %s184
                $region62: #{convgru_forward.1} parent=58 // loop_header_branch
                  %225 = sbr.rel (%p223) target = $region66
                $region63: #{convgru_forward.1} parent=58 // loop_body
                  %v229 = vld [vmem:[%s227] sm:$0xff]
                  %230 = vst [vmem:[%s228] sm:$0xff] %v229
                  %v231 = vld [vmem:[%s227 + $0x10] sm:$0xff]
                  %232 = vst [vmem:[%s228 + $0x8] sm:$0xff] %v231
                  %v233 = vld [vmem:[%s227 + $0x20] sm:$0xff]
                  %234 = vst [vmem:[%s228 + $0x10] sm:$0xff] %v233
                  %v235 = vld [vmem:[%s227 + $0x30] sm:$0xff]
                  %236 = vst [vmem:[%s228 + $0x18] sm:$0xff] %v235
                  %v237 = vld [vmem:[%s227 + $0x40] sm:$0xff]
                  %238 = vst [vmem:[%s228 + $0x20] sm:$0xff] %v237
                  %v239 = vld [vmem:[%s227 + $0x50] sm:$0xff]
                  %240 = vst [vmem:[%s228 + $0x28] sm:$0xff] %v239
                  %v241 = vld [vmem:[%s227 + $0x60] sm:$0xff]
                  %242 = vst [vmem:[%s228 + $0x30] sm:$0xff] %v241
                  %v243 = vld [vmem:[%s227 + $0x70] sm:$0xff]
                  %244 = vst [vmem:[%s228 + $0x38] sm:$0xff] %v243
                $region64: #{convgru_forward.1} parent=58 // loop_footer
                  %s226 = sadd.s32 1, %s222
                $region65: #{convgru_forward.1} parent=58 // loop_footer_branch
                  %221 = sbr.rel target = $region61
                $region66: #{convgru_forward.1} parent=58 // loop_exit
                  _
              $region59: #{convgru_forward.1} parent=43 // pred_fallthru
                _
              // Predicated region
              $region67: #{convgru_forward.1} parent=43 // pred_check
                _
              $region68: #{convgru_forward.1} parent=43 // pred_check_branch
                %246 = sbr.rel target = $region70
              $region69: #{convgru_forward.1} parent=43 // pred_region
                _
              $region70: #{convgru_forward.1} parent=43 // pred_fallthru
                _
            $region44: #{convgru_forward.1} parent=39 // pred_fallthru
              _
            // Predicated region
            $region45: #{convgru_forward.1} parent=39 // pred_check
              _
            $region46: #{convgru_forward.1} parent=39 // pred_check_branch
              %192 = sbr.rel target = $region48
            $region47: #{convgru_forward.1} parent=39 // pred_region
              %s194 = ssub.s32 256, 1
              loop: start=0, step=1, limit=1
              $region49: #{convgru_forward.1} parent=47 // loop_pre_header
                _
              $region50: #{convgru_forward.1} parent=47 // loop_header
                %s196 = sphi 0, %s200
                %p197 = scmp.ge.s32.totalorder %s196, 1
                %s201 = sphi %s186, %s186
                %s202 = sphi %s184, %s184
              $region51: #{convgru_forward.1} parent=47 // loop_header_branch
                %199 = sbr.rel (%p197) target = $region55
              $region52: #{convgru_forward.1} parent=47 // loop_body
                %v203 = vld [vmem:[%s201] sm:%s194]
                %204 = vst [vmem:[%s202] sm:%s194] %v203
                %v205 = vld [vmem:[%s201 + $0x10] sm:%s194]
                %206 = vst [vmem:[%s202 + $0x8] sm:%s194] %v205
                %v207 = vld [vmem:[%s201 + $0x20] sm:%s194]
                %208 = vst [vmem:[%s202 + $0x10] sm:%s194] %v207
                %v209 = vld [vmem:[%s201 + $0x30] sm:%s194]
                %210 = vst [vmem:[%s202 + $0x18] sm:%s194] %v209
                %v211 = vld [vmem:[%s201 + $0x40] sm:%s194]
                %212 = vst [vmem:[%s202 + $0x20] sm:%s194] %v211
                %v213 = vld [vmem:[%s201 + $0x50] sm:%s194]
                %214 = vst [vmem:[%s202 + $0x28] sm:%s194] %v213
                %v215 = vld [vmem:[%s201 + $0x60] sm:%s194]
                %216 = vst [vmem:[%s202 + $0x30] sm:%s194] %v215
                %v217 = vld [vmem:[%s201 + $0x70] sm:%s194]
                %218 = vst [vmem:[%s202 + $0x38] sm:%s194] %v217
              $region53: #{convgru_forward.1} parent=47 // loop_footer
                %s200 = sadd.s32 1, %s196
              $region54: #{convgru_forward.1} parent=47 // loop_footer_branch
                %195 = sbr.rel target = $region50
              $region55: #{convgru_forward.1} parent=47 // loop_exit
                _
            $region48: #{convgru_forward.1} parent=39 // pred_fallthru
              _
          $region40: #{convgru_forward.1} parent=35 // pred_fallthru
            _
          %247 = vnop
        $region36: #{convgru_forward.1} parent=31 // pred_fallthru
          _
      $region32: #{convgru_forward.1} parent=5 // pred_fallthru
        _
      %p248 = scmp.le.s32.totalorder 1, %s11
      %p249 = scmp.lt.s32.totalorder %s11, 3
      %p250 = pnand %p248, %p249
      %p251 = pneg %p250
      // Predicated region
      $region71: #{convgru_forward.1} parent=5 // pred_check
        _
      $region72: #{convgru_forward.1} parent=5 // pred_check_branch
        %253 = sbr.rel (%p250) target = $region74
      $region73: #{convgru_forward.1} parent=5 // pred_region
        %s254 = ssub.s32 %s11, 1
        %s255 = sand.u32 %s24, 1
        %s256 = sand.u32 %s24, 1
        %s257 = smul.addr %s256, 64
        %s258 = scalar_lea.vmem [#allocation2], %s257
        // Predicated region
        $region75: #{convgru_forward.1} parent=73 // pred_check
          %p259 = pneg %p37
        $region76: #{convgru_forward.1} parent=73 // pred_check_branch
          %261 = sbr.rel (%p259) target = $region78
        $region77: #{convgru_forward.1} parent=73 // pred_region
          _
        $region78: #{convgru_forward.1} parent=73 // pred_fallthru
          _
        %s262 = sand.u32 %s24, 1
        %s263 = sand.u32 %s24, 1
        %s264 = smul.addr %s263, 64
        %s265 = scalar_lea.vmem [#allocation2], %s264
        %p266 = pneg %p37
        %p267 = pneg %p34
        %p268 = pneg %p58
        %p269 = pneg %p55
        %p270 = pneg %p79
        %p271 = pneg %p76
        %p272 = pneg %p100
        %p273 = pneg %p97
        %p274 = pneg %p121
        %p275 = pneg %p118
        %p276 = pneg %p147
        %p277 = pneg %p144
        %s278 = sand.u32 %s134, 1
        %s279 = sand.u32 %s134, 1
        %s280 = smul.addr %s279, 32
        %s281 = scalar_lea.vmem [#allocation3], %s280
        %v283 = vld [vmem:[%s258] sm:$0xff]
        %v284 = vld [vmem:[%s258 + $0x8] sm:$0xff]
        %v285 = vld [vmem:[%s258 + $0x10] sm:$0xff]
        %v286 = vld [vmem:[%s258 + $0x18] sm:$0xff]
        %v287 = vld [vmem:[%s258 + $0x20] sm:$0xff]
        %v288 = vld [vmem:[%s258 + $0x28] sm:$0xff]
        %v289 = vld [vmem:[%s258 + $0x30] sm:$0xff]
        %v290 = vld [vmem:[%s258 + $0x38] sm:$0xff]
        %v291 = vpack.c.bf16 %v284, %v283
        %v292 = vpack.c.bf16 %v286, %v285
        %v293 = vpack.c.bf16 %v288, %v287
        %v294 = vpack.c.bf16 %v290, %v289
        %v295 = vld [vmem:[%s1] sm:$0xf]
        %v296 = vld [vmem:[%s1 + $0x4] sm:$0xf]
        %v297 = vld [vmem:[%s1 + $0x8] sm:$0xf]
        %v298 = vld [vmem:[%s1 + $0xc] sm:$0xf]
        %v299 = vld [vmem:[%s1 + $0x10] sm:$0xf]
        %v300 = vld [vmem:[%s1 + $0x14] sm:$0xf]
        %v301 = vld [vmem:[%s1 + $0x18] sm:$0xf]
        %v302 = vld [vmem:[%s1 + $0x1c] sm:$0xf]
        %v303 = vld [vmem:[%s1 + $0x20] sm:$0xf]
        %v304 = vld [vmem:[%s1 + $0x24] sm:$0xf]
        %v305 = vld [vmem:[%s1 + $0x28] sm:$0xf]
        %v306 = vld [vmem:[%s1 + $0x2c] sm:$0xf]
        %v319 = vunpack.c.l.b16 %v295
        %v320 = vunpack.c.l.b16 %v296
        %v321 = vunpack.c.l.b16 %v297
        %v322 = vunpack.c.l.b16 %v298
        %v323 = vunpack.c.l.b16 %v299
        %v324 = vunpack.c.l.b16 %v300
        %v325 = vunpack.c.l.b16 %v301
        %v326 = vunpack.c.l.b16 %v302
        %v327 = vunpack.c.l.b16 %v303
        %v328 = vunpack.c.l.b16 %v304
        %v329 = vunpack.c.l.b16 %v305
        %v330 = vunpack.c.l.b16 %v306
        %v331 = vpack.c.b16 %v320, %v319
        %v332 = vpack.c.b16 %v322, %v321
        %v333 = vpack.c.b16 %v324, %v323
        %v334 = vpack.c.b16 %v326, %v325
        %v335 = vpack.c.b16 %v328, %v327
        %v336 = vpack.c.b16 %v330, %v329
        %vm337 = vcmask 523264
        %v339 = vsel %vm337, %v331, 0
        %v342 = vsel %vm337, %v332, 0
        %v345 = vsel %vm337, %v333, 0
        %v348 = vsel %vm337, %v334, 0
        %v351 = vsel %vm337, %v335, 0
        %v354 = vsel %vm337, %v336, 0
        %356 = vmatprep.subr.bf16.mxu0 0
        %357 = vmatpush1.bf16.msra.mxu0 0
        %358 = vmatprep.subr.bf16.mxu0 0
        %359 = vmatpush1.bf16.msra.mxu0 0
        %360 = vmatprep.subr.bf16.mxu0 0
        %361 = vmatpush1.bf16.msra.mxu0 0
        %362 = vmatprep.subr.bf16.mxu0 0
        %363 = vmatpush1.bf16.msra.mxu0 0
        %364 = vmatprep.subr.bf16.mxu0 0
        %365 = vmatpush1.bf16.msra.mxu0 %v294
        %366 = vmatprep.subr.bf16.mxu0 0
        %367 = vmatpush1.bf16.msra.mxu0 %v293
        %368 = vmatprep.subr.bf16.mxu0 0
        %369 = vmatpush1.bf16.msra.mxu0 %v292
        %370 = vmatprep.subr.bf16.mxu0 0
        %371 = vmatpush1.bf16.msra.mxu0 %v291
        %372 = vmatprep.subr.bf16.mxu0 0
        %373 = vmatpush2.bf16.msra.mxu0 0
        %374 = vmatprep.subr.bf16.mxu0 0
        %375 = vmatpush2.bf16.msra.mxu0 0
        %376 = vmatprep.subr.bf16.mxu0 0
        %377 = vmatpush2.bf16.msra.mxu0 0
        %378 = vmatprep.subr.bf16.mxu0 0
        %379 = vmatpush2.bf16.msra.mxu0 0
        %380 = vmatprep.subr.bf16.mxu0 0
        %381 = vmatpush2.bf16.msra.mxu0 0
        %382 = vmatprep.subr.bf16.mxu0 0
        %383 = vmatpush2.bf16.msra.mxu0 0
        %384 = vmatprep.subr.bf16.mxu0 0
        %385 = vmatpush2.bf16.msra.mxu0 0
        %386 = vmatprep.subr.bf16.mxu0 0
        %387 = vmatpush2.bf16.msra.mxu0 0
        %388 = vmatprep.mubr.bf16.mxu0 0
        %389 = vmatmul.mubr.bf16.gmra.mxu0 %v339
        %v390 = vpop.f32.mrf.mxu0
        %v391 = vadd.f32 0.0, %v390
        %v392 = vpop.f32.mrf.mxu0
        %v393 = vpop.f32.mrf.mxu0
        %v394 = vadd.f32 0.0, %v393
        %v395 = vpop.f32.mrf.mxu0
        %396 = vmatprep.mubr.bf16.mxu0 0
        %397 = vmatmul.mubr.bf16.gmra.mxu0 %v342
        %v398 = vpop.f32.mrf.mxu0
        %v399 = vadd.f32 0.0, %v398
        %v400 = vpop.f32.mrf.mxu0
        %v401 = vpop.f32.mrf.mxu0
        %v402 = vadd.f32 0.0, %v401
        %v403 = vpop.f32.mrf.mxu0
        %404 = vmatprep.mubr.bf16.mxu0 0
        %405 = vmatmul.mubr.bf16.gmra.mxu0 %v345
        %v406 = vpop.f32.mrf.mxu0
        %v407 = vadd.f32 0.0, %v406
        %v408 = vpop.f32.mrf.mxu0
        %v409 = vpop.f32.mrf.mxu0
        %v410 = vadd.f32 0.0, %v409
        %v411 = vpop.f32.mrf.mxu0
        %412 = vmatprep.mubr.bf16.mxu0 0
        %413 = vmatmul.mubr.bf16.gmra.mxu0 %v348
        %v414 = vpop.f32.mrf.mxu0
        %v415 = vadd.f32 0.0, %v414
        %v416 = vpop.f32.mrf.mxu0
        %v417 = vpop.f32.mrf.mxu0
        %v418 = vadd.f32 0.0, %v417
        %v419 = vpop.f32.mrf.mxu0
        %420 = vmatprep.mubr.bf16.mxu0 0
        %421 = vmatmul.mubr.bf16.gmra.mxu0 %v351
        %v422 = vpop.f32.mrf.mxu0
        %v423 = vadd.f32 0.0, %v422
        %v424 = vpop.f32.mrf.mxu0
        %v425 = vpop.f32.mrf.mxu0
        %v426 = vadd.f32 0.0, %v425
        %v427 = vpop.f32.mrf.mxu0
        %428 = vmatprep.mubr.bf16.mxu0 0
        %429 = vmatmul.mubr.bf16.gmra.mxu0 %v354
        %v430 = vpop.f32.mrf.mxu0
        %v431 = vadd.f32 0.0, %v430
        %v432 = vpop.f32.mrf.mxu0
        %v433 = vpop.f32.mrf.mxu0
        %v434 = vadd.f32 0.0, %v433
        %v435 = vpop.f32.mrf.mxu0
        %436 = vdwg.mxu0
        %v437 = vmul.f32 %v391, 0.5
        %v438 = vmul.f32 %v394, 0.5
        %v439 = vmul.f32 %v399, 0.5
        %v440 = vmul.f32 %v402, 0.5
        %v441 = vtanh.pop %v437
        %v442 = vtanh.pop %v438
        %v443 = vtanh.pop %v439
        %v444 = vtanh.pop %v440
        %v445 = vmul.f32 %v441, 0.5
        %v446 = vmul.f32 %v442, 0.5
        %v447 = vmul.f32 %v443, 0.5
        %v448 = vmul.f32 %v444, 0.5
        %v449 = vadd.f32 %v445, 0.5
        %v450 = vadd.f32 %v446, 0.5
        %v451 = vadd.f32 %v447, 0.5
        %v452 = vadd.f32 %v448, 0.5
        %v453 = vmul.f32 %v407, 0.5
        %v454 = vmul.f32 %v410, 0.5
        %v455 = vmul.f32 %v415, 0.5
        %v456 = vmul.f32 %v418, 0.5
        %v457 = vtanh.pop %v453
        %v458 = vtanh.pop %v454
        %v459 = vtanh.pop %v455
        %v460 = vtanh.pop %v456
        %v461 = vmul.f32 %v457, 0.5
        %v462 = vmul.f32 %v458, 0.5
        %v463 = vmul.f32 %v459, 0.5
        %v464 = vmul.f32 %v460, 0.5
        %v465 = vadd.f32 %v461, 0.5
        %v466 = vadd.f32 %v462, 0.5
        %v467 = vadd.f32 %v463, 0.5
        %v468 = vadd.f32 %v464, 0.5
        %v469 = vmul.f32 %v465, %v283
        %v470 = vmul.f32 %v466, %v284
        %v471 = vmul.f32 %v467, %v285
        %v472 = vmul.f32 %v468, %v286
        %v473 = vpack.c.bf16 %v470, %v469
        %v474 = vpack.c.bf16 %v472, %v471
        %v475 = vld [vmem:[%s2] sm:$0xf]
        %v476 = vld [vmem:[%s2 + $0x4] sm:$0xf]
        %v477 = vld [vmem:[%s2 + $0x8] sm:$0xf]
        %v478 = vld [vmem:[%s2 + $0xc] sm:$0xf]
        %v483 = vunpack.c.l.b16 %v475
        %v484 = vunpack.c.l.b16 %v476
        %v485 = vunpack.c.l.b16 %v477
        %v486 = vunpack.c.l.b16 %v478
        %v487 = vpack.c.b16 %v484, %v483
        %v488 = vpack.c.b16 %v486, %v485
        %vm489 = vcmask 261120
        %v491 = vsel %vm489, %v487, 0
        %v494 = vsel %vm489, %v488, 0
        %496 = vmatprep.subr.bf16.mxu0 0
        %497 = vmatpush1.bf16.msra.mxu0 0
        %498 = vmatprep.subr.bf16.mxu0 0
        %499 = vmatpush1.bf16.msra.mxu0 0
        %500 = vmatprep.subr.bf16.mxu0 0
        %501 = vmatpush1.bf16.msra.mxu0 0
        %502 = vmatprep.subr.bf16.mxu0 0
        %503 = vmatpush1.bf16.msra.mxu0 0
        %504 = vmatprep.subr.bf16.mxu0 0
        %505 = vmatpush1.bf16.msra.mxu0 0
        %506 = vmatprep.subr.bf16.mxu0 0
        %507 = vmatpush1.bf16.msra.mxu0 0
        %508 = vmatprep.subr.bf16.mxu0 0
        %509 = vmatpush1.bf16.msra.mxu0 %v474
        %510 = vmatprep.subr.bf16.mxu0 0
        %511 = vmatpush1.bf16.msra.mxu0 %v473
        %512 = vmatprep.subr.bf16.mxu0 0
        %513 = vmatpush2.bf16.msra.mxu0 0
        %514 = vmatprep.subr.bf16.mxu0 0
        %515 = vmatpush2.bf16.msra.mxu0 0
        %516 = vmatprep.subr.bf16.mxu0 0
        %517 = vmatpush2.bf16.msra.mxu0 0
        %518 = vmatprep.subr.bf16.mxu0 0
        %519 = vmatpush2.bf16.msra.mxu0 0
        %520 = vmatprep.subr.bf16.mxu0 0
        %521 = vmatpush2.bf16.msra.mxu0 0
        %522 = vmatprep.subr.bf16.mxu0 0
        %523 = vmatpush2.bf16.msra.mxu0 0
        %524 = vmatprep.subr.bf16.mxu0 0
        %525 = vmatpush2.bf16.msra.mxu0 0
        %526 = vmatprep.subr.bf16.mxu0 0
        %527 = vmatpush2.bf16.msra.mxu0 0
        %528 = vmatprep.mubr.bf16.mxu0 0
        %529 = vmatmul.mubr.bf16.gmra.mxu0 %v491
        %v530 = vpop.f32.mrf.mxu0
        %v531 = vadd.f32 0.0, %v530
        %v532 = vpop.f32.mrf.mxu0
        %v533 = vpop.f32.mrf.mxu0
        %v534 = vadd.f32 0.0, %v533
        %v535 = vpop.f32.mrf.mxu0
        %536 = vmatprep.mubr.bf16.mxu0 0
        %537 = vmatmul.mubr.bf16.gmra.mxu0 %v494
        %v538 = vpop.f32.mrf.mxu0
        %v539 = vadd.f32 0.0, %v538
        %v540 = vpop.f32.mrf.mxu0
        %v541 = vpop.f32.mrf.mxu0
        %v542 = vadd.f32 0.0, %v541
        %v543 = vpop.f32.mrf.mxu0
        %544 = vdwg.mxu0
        %v545 = vadd.f32 %v423, %v531
        %v546 = vadd.f32 %v426, %v534
        %v547 = vadd.f32 %v431, %v539
        %v548 = vadd.f32 %v434, %v542
        %v549 = vsub.f32 %v545, %v283
        %v550 = vsub.f32 %v546, %v284
        %v551 = vsub.f32 %v547, %v285
        %v552 = vsub.f32 %v548, %v286
        %v553 = vmul.f32 %v449, %v549
        %v554 = vmul.f32 %v450, %v550
        %v555 = vmul.f32 %v451, %v551
        %v556 = vmul.f32 %v452, %v552
        %v557 = vadd.f32 %v283, %v553
        %v558 = vadd.f32 %v284, %v554
        %v559 = vadd.f32 %v285, %v555
        %v560 = vadd.f32 %v286, %v556
        %v561 = vadd.f32 %v557, %v558
        %v562 = vadd.f32 %v561, %v559
        %v563 = vadd.f32 %v562, %v560
        %v564 = vrot.slane %v563, 4
        %v565 = vadd.f32 %v563, %v564
        %v566 = vrot.slane %v565, 2
        %v567 = vadd.f32 %v565, %v566
        %v568 = vrot.slane %v567, 1
        %v569 = vadd.f32 %v567, %v568
        %v570 = vrcp.pop 32.0
        %v571 = vmul.f32 %v569, %v570
        %v572 = vsub.f32 %v557, %v571
        %v573 = vsub.f32 %v558, %v571
        %v574 = vsub.f32 %v559, %v571
        %v575 = vsub.f32 %v560, %v571
        %v576 = vmul.f32 %v572, %v572
        %v577 = vmul.f32 %v573, %v573
        %v578 = vmul.f32 %v574, %v574
        %v579 = vmul.f32 %v575, %v575
        %v580 = vadd.f32 %v576, %v577
        %v581 = vadd.f32 %v580, %v578
        %v582 = vadd.f32 %v581, %v579
        %v583 = vrot.slane %v582, 4
        %v584 = vadd.f32 %v582, %v583
        %v585 = vrot.slane %v584, 2
        %v586 = vadd.f32 %v584, %v585
        %v587 = vrot.slane %v586, 1
        %v588 = vadd.f32 %v586, %v587
        %v589 = vmul.f32 %v588, %v570
        %v590 = vadd.f32 %v589, 1e-05
        %v591 = vrsqrt.pop %v590
        %v592 = vmul.f32 %v572, %v591
        %v593 = vmul.f32 %v573, %v591
        %v594 = vmul.f32 %v574, %v591
        %v595 = vmul.f32 %v575, %v591
        %v596 = vld [vmem:[%s3] sm:$0xff]
        %v597 = vld [vmem:[%s3 + $0x8] sm:$0xff]
        %v598 = vld [vmem:[%s3 + $0x10] sm:$0xff]
        %v599 = vld [vmem:[%s3 + $0x18] sm:$0xff]
        %601 = vset.pattern.permute.xlu0 0
        %602 = vperm.xlu0 %601, %v596
        %v603 = vpop.permute.xlu0 %602
        %606 = vset.pattern.permute.xlu0 0
        %607 = vperm.xlu0 %606, %v597
        %v608 = vpop.permute.xlu0 %607
        %611 = vset.pattern.permute.xlu0 0
        %612 = vperm.xlu0 %611, %v598
        %v613 = vpop.permute.xlu0 %612
        %616 = vset.pattern.permute.xlu0 0
        %617 = vperm.xlu0 %616, %v599
        %v618 = vpop.permute.xlu0 %617
        %v620 = vmul.f32 %v592, %v603
        %v621 = vmul.f32 %v593, %v608
        %v622 = vmul.f32 %v594, %v613
        %v623 = vmul.f32 %v595, %v618
        %v624 = vld [vmem:[%s4] sm:$0xff]
        %v625 = vld [vmem:[%s4 + $0x8] sm:$0xff]
        %v626 = vld [vmem:[%s4 + $0x10] sm:$0xff]
        %v627 = vld [vmem:[%s4 + $0x18] sm:$0xff]
        %629 = vset.pattern.permute.xlu0 0
        %630 = vperm.xlu0 %629, %v624
        %v631 = vpop.permute.xlu0 %630
        %634 = vset.pattern.permute.xlu0 0
        %635 = vperm.xlu0 %634, %v625
        %v636 = vpop.permute.xlu0 %635
        %639 = vset.pattern.permute.xlu0 0
        %640 = vperm.xlu0 %639, %v626
        %v641 = vpop.permute.xlu0 %640
        %644 = vset.pattern.permute.xlu0 0
        %645 = vperm.xlu0 %644, %v627
        %v646 = vpop.permute.xlu0 %645
        %v648 = vadd.f32 %v620, %v631
        %v649 = vadd.f32 %v621, %v636
        %v650 = vadd.f32 %v622, %v641
        %v651 = vadd.f32 %v623, %v646
        %652 = vst [vmem:[%s281] sm:$0xff] %v648
        %653 = vst [vmem:[%s281 + $0x8] sm:$0xff] %v649
        %654 = vst [vmem:[%s281 + $0x10] sm:$0xff] %v650
        %655 = vst [vmem:[%s281 + $0x18] sm:$0xff] %v651
        %s656 = sand.u32 %s134, 1
        %s657 = sand.u32 %s134, 1
        %s658 = smul.addr %s657, 32
        %s659 = scalar_lea.vmem [#allocation3], %s658
        // Predicated region
        $region79: #{convgru_forward.1} parent=73 // pred_check
          %p660 = pneg %p144
        $region80: #{convgru_forward.1} parent=73 // pred_check_branch
          %662 = sbr.rel (%p660) target = $region82
        $region81: #{convgru_forward.1} parent=73 // pred_region
          %s663 = smul.addr %s16, 8
          %s664 = scalar_lea.vmem %s5, %s663
          // Predicated region
          $region83: #{convgru_forward.1} parent=81 // pred_check
            _
          $region84: #{convgru_forward.1} parent=81 // pred_check_branch
            %666 = sbr.rel (0) target = $region86
          $region85: #{convgru_forward.1} parent=81 // pred_region
            // Predicated region
            $region87: #{convgru_forward.1} parent=85 // pred_check
              _
            $region88: #{convgru_forward.1} parent=85 // pred_check_branch
              %668 = sbr.rel (0) target = $region90
            $region89: #{convgru_forward.1} parent=85 // pred_region
              // Predicated region
              $region102: #{convgru_forward.1} parent=89 // pred_check
                _
              $region103: #{convgru_forward.1} parent=89 // pred_check_branch
                %690 = sbr.rel (0) target = $region105
              $region104: #{convgru_forward.1} parent=89 // pred_region
                loop: start=0, step=1, limit=1
                $region106: #{convgru_forward.1} parent=104 // loop_pre_header
                  _
                $region107: #{convgru_forward.1} parent=104 // loop_header
                  %s692 = sphi 0, %s696
                  %p693 = scmp.ge.s32.totalorder %s692, 1
                  %s697 = sphi %s659, %s659
                  %s698 = sphi %s664, %s664
                $region108: #{convgru_forward.1} parent=104 // loop_header_branch
                  %695 = sbr.rel (%p693) target = $region112
                $region109: #{convgru_forward.1} parent=104 // loop_body
                  %v699 = vld [vmem:[%s697] sm:$0xff]
                  %700 = vst [vmem:[%s698] sm:$0xff] %v699
                  %v701 = vld [vmem:[%s697 + $0x8] sm:$0xff]
                  %702 = vst [vmem:[%s698 + $0x10] sm:$0xff] %v701
                  %v703 = vld [vmem:[%s697 + $0x10] sm:$0xff]
                  %704 = vst [vmem:[%s698 + $0x20] sm:$0xff] %v703
                  %v705 = vld [vmem:[%s697 + $0x18] sm:$0xff]
                  %706 = vst [vmem:[%s698 + $0x30] sm:$0xff] %v705
                $region110: #{convgru_forward.1} parent=104 // loop_footer
                  %s696 = sadd.s32 1, %s692
                $region111: #{convgru_forward.1} parent=104 // loop_footer_branch
                  %691 = sbr.rel target = $region107
                $region112: #{convgru_forward.1} parent=104 // loop_exit
                  _
              $region105: #{convgru_forward.1} parent=89 // pred_fallthru
                _
              // Predicated region
              $region113: #{convgru_forward.1} parent=89 // pred_check
                _
              $region114: #{convgru_forward.1} parent=89 // pred_check_branch
                %708 = sbr.rel target = $region116
              $region115: #{convgru_forward.1} parent=89 // pred_region
                _
              $region116: #{convgru_forward.1} parent=89 // pred_fallthru
                _
            $region90: #{convgru_forward.1} parent=85 // pred_fallthru
              _
            // Predicated region
            $region91: #{convgru_forward.1} parent=85 // pred_check
              _
            $region92: #{convgru_forward.1} parent=85 // pred_check_branch
              %670 = sbr.rel target = $region94
            $region93: #{convgru_forward.1} parent=85 // pred_region
              %s672 = ssub.s32 256, 1
              loop: start=0, step=1, limit=1
              $region95: #{convgru_forward.1} parent=93 // loop_pre_header
                _
              $region96: #{convgru_forward.1} parent=93 // loop_header
                %s674 = sphi 0, %s678
                %p675 = scmp.ge.s32.totalorder %s674, 1
                %s679 = sphi %s659, %s659
                %s680 = sphi %s664, %s664
              $region97: #{convgru_forward.1} parent=93 // loop_header_branch
                %677 = sbr.rel (%p675) target = $region101
              $region98: #{convgru_forward.1} parent=93 // loop_body
                %v681 = vld [vmem:[%s679] sm:%s672]
                %682 = vst [vmem:[%s680] sm:%s672] %v681
                %v683 = vld [vmem:[%s679 + $0x8] sm:%s672]
                %684 = vst [vmem:[%s680 + $0x10] sm:%s672] %v683
                %v685 = vld [vmem:[%s679 + $0x10] sm:%s672]
                %686 = vst [vmem:[%s680 + $0x20] sm:%s672] %v685
                %v687 = vld [vmem:[%s679 + $0x18] sm:%s672]
                %688 = vst [vmem:[%s680 + $0x30] sm:%s672] %v687
              $region99: #{convgru_forward.1} parent=93 // loop_footer
                %s678 = sadd.s32 1, %s674
              $region100: #{convgru_forward.1} parent=93 // loop_footer_branch
                %673 = sbr.rel target = $region96
              $region101: #{convgru_forward.1} parent=93 // loop_exit
                _
            $region94: #{convgru_forward.1} parent=85 // pred_fallthru
              _
          $region86: #{convgru_forward.1} parent=81 // pred_fallthru
            _
          %709 = vnop
        $region82: #{convgru_forward.1} parent=73 // pred_fallthru
          _
      $region74: #{convgru_forward.1} parent=5 // pred_fallthru
        _
      %p710 = scmp.le.s32.totalorder 2, %s11
      // Predicated region
      $region117: #{convgru_forward.1} parent=5 // pred_check
        %p711 = pneg %p710
      $region118: #{convgru_forward.1} parent=5 // pred_check_branch
        %713 = sbr.rel (%p711) target = $region120
      $region119: #{convgru_forward.1} parent=5 // pred_region
        %s714 = ssub.s32 %s11, 2
        // Predicated region
        $region121: #{convgru_forward.1} parent=119 // pred_check
          %p715 = pneg %p150
        $region122: #{convgru_forward.1} parent=119 // pred_check_branch
          %717 = sbr.rel (%p715) target = $region124
        $region123: #{convgru_forward.1} parent=119 // pred_region
          %s718 = sand.u32 %s135, 1
          %s719 = sand.u32 %s135, 1
          %s720 = smul.addr %s719, 32
          %s721 = scalar_lea.vmem [#allocation3], %s720
        $region124: #{convgru_forward.1} parent=119 // pred_fallthru
          _
      $region120: #{convgru_forward.1} parent=5 // pred_fallthru
        _
    $region6: #{convgru_forward.1} parent=1 // loop_footer
      %s15 = sadd.s32 1, %s11
    $region7: #{convgru_forward.1} parent=1 // loop_footer_branch
      %10 = sbr.rel target = $region3
    $region8: #{convgru_forward.1} parent=1 // loop_exit
      _

</llo_original>
